<compile_context>
chip_gen: v5e
topology: v5e:2x2
jax: 0.10.0
libtpu: 0.0.40
codegen_flags: <defaults>
</compile_context>

<pallas_src>
import math

import jax
import jax.numpy as jnp
from jax.experimental import pallas as pl
from jax.experimental.pallas import tpu as pltpu

_LANE = 128
_TARGET_TILE_BYTES = 2 * 1024 * 1024     # ~2 MiB per buffer (HBM-bound sweet spot)
_VMEM_LIMIT_BYTES = 32 * 1024 * 1024     # explicit: v5e scoped default is only 16 MiB
_MIN_TOTAL_BYTES = 1 << 20               # below this the fused XLA multiply wins
_MIN_SAMPLE_BYTES = 256 * 1024           # per-sample slab below this -> XLA fallback
_DEFAULT_MIN_GRID_STEPS = 8              # pass min_grid_steps=16 on v7x (2 TCs)


def _sublane_quantum(itemsize: int) -> int:
    # 8 sublanes for 4-byte dtypes; packed dtypes pack 2/4 rows per sublane.
    return max(8, 32 // itemsize)


def _drop_path_kernel(scale_ref, x_ref, o_ref):
    # scale_ref: SMEM (B,) f32 (scalar-prefetched); x_ref/o_ref: (tr, C) tile of
    # the sample selected by grid axis 0.  Multiply in f32 (single rounding),
    # cast back to the activation dtype on store.
    s = scale_ref[pl.program_id(0)]
    o_ref[...] = (x_ref[...] * s).astype(o_ref.dtype)


def _drop_path_residual_kernel(scale_ref, x_ref, r_ref, o_ref):
    # Fused: out = residual + x * scale[b]  (3 HBM passes instead of 5).
    s = scale_ref[pl.program_id(0)]
    o_ref[...] = (r_ref[...] + x_ref[...] * s).astype(o_ref.dtype)


def _xla_drop_path(x, scale, residual):
    # Fused XLA broadcast-multiply: already at the HBM roofline; used for
    # ragged / tiny shapes where the Pallas grid overhead would dominate.
    bshape = (x.shape[0],) + (1,) * (x.ndim - 1)
    out = x * scale.reshape(bshape)
    if residual is not None:
        out = out + residual
    return out.astype(x.dtype)


def _choose_row_tile(R, C, itemsize, B, min_grid_steps):
    sub = _sublane_quantum(itemsize)
    row_bytes = C * itemsize
    # VMEM budget cap: ~2 MiB per buffer.
    vmem_rows = max(sub, (_TARGET_TILE_BYTES // row_bytes) // sub * sub)
    # Pipeline-length floor: want B * cdiv(R, tr) >= min_grid_steps so the
    # prologue/epilogue DMAs stay overlapped.
    chunks_wanted = max(1, (min_grid_steps + B - 1) // B)
    if chunks_wanted > 1:
        step_rows = max(sub, (R // chunks_wanted) // sub * sub)
    else:
        step_rows = R
    tr = min(vmem_rows, step_rows)
    if tr >= R:
        tr = R                       # full-R block (always legal for BlockSpec)
    return tr


def drop_path_pallas(x, drop_prob: float, key, training: bool = True, *,
                     residual=None, donate_x: bool = False,
                     min_grid_steps: int = _DEFAULT_MIN_GRID_STEPS,
                     force_pallas: bool = False):
    """Pallas implementation of drop_path(x, drop_prob, training).

    Optionally fuses a residual add (out = residual + drop_path(x)) and/or
    aliases x to the output (donate_x=True) when the caller can donate x.
    """
    if residual is not None and residual.shape != x.shape:
        raise ValueError("residual must have the same shape as x")
    if drop_prob is None or drop_prob == 0.0 or not training:
        return x if residual is None else (x + residual).astype(x.dtype)

    keep_prob = 1.0 - float(drop_prob)
    if keep_prob <= 0.0:
        # drop_prob -> 1.0 gives keep_prob -> 0 and an inf/nan scale.
        raise ValueError("drop_prob must be < 1.0 for drop_path")

    B = x.shape[0]
    N = math.prod(x.shape[1:])
    itemsize = jnp.dtype(x.dtype).itemsize

    # Per-sample 0/1 mask, same recipe as the torch reference: floor(keep+U).
    u = jax.random.uniform(key, (B,), dtype=jnp.float32)
    scale = jnp.floor(keep_prob + u) / keep_prob          # (B,) f32

    # Lane-dense column width: largest of these that divides N.
    C = next((c for c in (2048, 1024, 512, 256, 128) if N % c == 0), None)

    total_bytes = B * N * itemsize
    small = (total_bytes < _MIN_TOTAL_BYTES or N * itemsize < _MIN_SAMPLE_BYTES)
    if C is None or (small and not force_pallas):
        # TODO(synk): ragged tails (N % 128 != 0) stay on the fused XLA path; an
        # in-kernel lane-masked edge block could bring them onto the Pallas path.
        return _xla_drop_path(x, scale, residual)

    # ---- lane/sublane-dense re-layout: each sample -> (R, C) slab ----------
    R = N // C
    x3 = x.reshape(B, R, C)
    tr = _choose_row_tile(R, C, itemsize, B, min_grid_steps)
    grid = (B, pl.cdiv(R, tr))                  # edge row blocks masked by Pallas
    blk = pl.BlockSpec((None, tr, C), lambda b, r, scale_sm: (b, r, 0))

    operands = [scale, x3]
    in_specs = [blk]
    kernel = _drop_path_kernel
    n_passes = 2                                # read x + write out
    if residual is not None:
        operands.append(residual.reshape(B, R, C))
        in_specs = [blk, blk]
        kernel = _drop_path_residual_kernel
        n_passes = 3

    out = pl.pallas_call(
        kernel,
        out_shape=jax.ShapeDtypeStruct((B, R, C), x.dtype),
        grid_spec=pltpu.PrefetchScalarGridSpec(
            num_scalar_prefetch=1,              # scale -> SMEM
            grid=grid,
            in_specs=in_specs,
            out_specs=blk,
        ),
        compiler_params=pltpu.CompilerParams(
            # Both axes independent: lets v7x shard the grid across its 2 TCs;
            # near-neutral on single-core v5e/v6e.
            dimension_semantics=("parallel", "parallel"),
            vmem_limit_bytes=_VMEM_LIMIT_BYTES),
        cost_estimate=pl.CostEstimate(
            flops=(2 if residual is not None else 1) * B * N,
            transcendentals=0,
            bytes_accessed=n_passes * B * N * itemsize),
        input_output_aliases=({1: 0} if donate_x else {}),   # x (arg 1) -> out
    )(*operands)

    return out.reshape(x.shape)


class DropPathPallas:
    """Mirror of the PyTorch DropPath module."""

    def __init__(self, drop_prob=None):
        self.drop_prob = drop_prob
        self.training = True

    def __call__(self, x, key, **kwargs):
        return drop_path_pallas(x, self.drop_prob, key,
                                training=self.training, **kwargs)


if __name__ == "__main__":
    root = jax.random.PRNGKey(0)
    kx, kd, kx2, kd2, kx3, kd3, kr = jax.random.split(root, 7)

    drop_prob = 0.3
    keep_prob = 1.0 - drop_prob
    module = DropPathPallas(drop_prob=drop_prob)

    # --- small NCHW input, forced through the Pallas path -------------------
    x = jax.random.normal(kx, (2, 4, 16, 16), dtype=jnp.float32)
    y = jax.block_until_ready(module(x, kd, force_pallas=True))
    u = jax.random.uniform(kd, (2,), dtype=jnp.float32)
    mask = jnp.floor(keep_prob + u).reshape(2, 1, 1, 1)
    y_ref = x / keep_prob * mask
    assert y.shape == x.shape and y.dtype == x.dtype
    assert jnp.allclose(y, y_ref, rtol=1e-5, atol=1e-6), "mismatch (small f32)"

    # --- larger CLIP-style image batch: default path, edge row tiles --------
    x2 = jax.random.normal(kx2, (4, 3, 224, 224), dtype=jnp.float32)
    y2 = jax.block_until_ready(module(x2, kd2))
    u2 = jax.random.uniform(kd2, (4,), dtype=jnp.float32)
    mask2 = jnp.floor(keep_prob + u2).reshape(4, 1, 1, 1)
    y2_ref = x2 / keep_prob * mask2
    assert jnp.allclose(y2, y2_ref, rtol=1e-5, atol=1e-6), "mismatch (large f32)"

    # --- fused residual add (training-graph fusion path) --------------------
    r2 = jax.random.normal(kr, x2.shape, dtype=jnp.float32)
    y2r = jax.block_until_ready(module(x2, kd2, residual=r2))
    assert jnp.allclose(y2r, y2_ref + r2, rtol=1e-5, atol=1e-5), "mismatch (residual)"

    # --- bf16 input: dtype-aware sublane tiling (16-row quantum) ------------
    x3 = jax.random.normal(kx3, (2, 8, 56, 56), dtype=jnp.float32).astype(jnp.bfloat16)
    y3 = jax.block_until_ready(module(x3, kd3, force_pallas=True))
    u3 = jax.random.uniform(kd3, (2,), dtype=jnp.float32)
    scale3 = (jnp.floor(keep_prob + u3) / keep_prob).reshape(2, 1, 1, 1)
    y3_ref = (x3.astype(jnp.float32) * scale3).astype(jnp.bfloat16)
    assert y3.dtype == jnp.bfloat16
    assert jnp.allclose(y3.astype(jnp.float32), y3_ref.astype(jnp.float32),
                        rtol=1e-2, atol=1e-2), "mismatch (bf16)"

    # --- ragged feature count: XLA-roofline fallback -------------------------
    x4 = jax.random.normal(kx, (2, 5, 7, 7), dtype=jnp.float32)
    y4 = jax.block_until_ready(module(x4, kd))
    mask4 = jnp.floor(keep_prob + jax.random.uniform(kd, (2,), dtype=jnp.float32))
    y4_ref = x4 / keep_prob * mask4.reshape(2, 1, 1, 1)
    assert jnp.allclose(y4, y4_ref, rtol=1e-5, atol=1e-6), "mismatch (ragged)"

    # --- eval mode: identity --------------------------------------------------
    module.training = False
    y_eval = jax.block_until_ready(module(x, kd))
    assert jnp.allclose(y_eval, x), "eval mode must be identity"

    print("KERNEL_OK")
</pallas_src>

<mosaic_0001>
module attributes {stable_mosaic.version = 11 : i64} {
  func.func @_drop_path_kernel(%arg0: i32, %arg1: i32, %arg2: memref<2xf32, #tpu.memory_space<smem>>, %arg3: memref<1x1x1024xf32, #tpu.memory_space<vmem>>, %arg4: memref<1x1x1024xf32, #tpu.memory_space<vmem>>) attributes {dimension_semantics = [#tpu.dimension_semantics<parallel>, #tpu.dimension_semantics<parallel>], iteration_bounds = array<i64: 2, 1>, scalar_prefetch = 1 : i64, scratch_operands = 0 : i64, tpu.core_type = #tpu.core_type<tc>, window_params = [{transform_indices = @transform_0, window_bounds = array<i64: 1, 1, 1024>}, {transform_indices = @transform_1, window_bounds = array<i64: 1, 1, 1024>}]} {
    %0 = arith.index_cast %arg0 : i32 to index
    %1 = memref.load %arg2[%0] : memref<2xf32, #tpu.memory_space<smem>>
    %c0 = arith.constant 0 : index
    %c0_0 = arith.constant 0 : index
    %c0_1 = arith.constant 0 : index
    %2 = vector.load %arg3[%c0, %c0_0, %c0_1] : memref<1x1x1024xf32, #tpu.memory_space<vmem>>, vector<1x1x1024xf32>
    %3 = vector.shape_cast %2 : vector<1x1x1024xf32> to vector<1x1024xf32>
    %4 = vector.broadcast %1 : f32 to vector<1x1024xf32>
    %5 = arith.mulf %3, %4 : vector<1x1024xf32>
    %c0_2 = arith.constant 0 : index
    %c0_3 = arith.constant 0 : index
    %c0_4 = arith.constant 0 : index
    %6 = vector.load %arg4[%c0_2, %c0_3, %c0_4] : memref<1x1x1024xf32, #tpu.memory_space<vmem>>, vector<1x1x1024xf32>
    %7 = vector.shape_cast %6 : vector<1x1x1024xf32> to vector<1x1024xf32>
    %8 = vector.shape_cast %5 : vector<1x1024xf32> to vector<1x1x1024xf32>
    tpu.vector_store %arg4[%c0_2, %c0_3, %c0_4], %8 {strides = array<i32>} : memref<1x1x1024xf32, #tpu.memory_space<vmem>>, vector<1x1x1024xf32>,
    return
  }
  func.func @transform_0(%arg0: i32, %arg1: i32, %arg2: memref<2xf32, #tpu.memory_space<smem>>) -> (i32, i32, i32) {
    %c0_i32 = arith.constant 0 : i32
    %c0_i32_0 = arith.constant 0 : i32
    return %arg0, %arg1, %c0_i32 : i32, i32, i32
  }
  func.func @transform_1(%arg0: i32, %arg1: i32, %arg2: memref<2xf32, #tpu.memory_space<smem>>) -> (i32, i32, i32) {
    %c0_i32 = arith.constant 0 : i32
    %c0_i32_0 = arith.constant 0 : i32
    return %arg0, %arg1, %c0_i32 : i32, i32, i32
  }
}

</mosaic_0001>

<llo_original>
// kernel: tpu_custom_call.1
$region0: #{tpu_custom_call.1}
  #allocation0 [shape = 'u32[]', space=smem, size = 0x4, offset = 0x4, fixed_abs, tag = 'smem constant byte address 0x4 - core index']
  #allocation1 [shape = 'u32[72,128]{1,0:T(1,128)}', space=vmem, size = 0x9000, scoped, tag = 'internal scratch']
  #allocation2 [shape = 's32[1]{0}', space=sflag, size = 0x4, scoped, tag = 'scoped memory for tpu_custom_call.1']
  #allocation3 [shape = 'u8[512]{0}', space=smem, size = 0x200, scoped, tag = 'prefetched SMEM operand 0']
  %s0 = inlined_call_operand.hbm [shape: f32[2], index: 0, kind: input, shape index: {}]
  %s1 = inlined_call_operand.hbm [shape: f32[2,1,1024], index: 1, kind: input, shape index: {}]
  %s2 = inlined_call_operand.hbm [shape: f32[2,1,1024], index: 2, kind: output, shape index: {}]
  %s3 = sld [smem:[#allocation0]]
  $region41: #{tpu_custom_call.1} parent=0
    _
  %s5 = ssub.s32 1, %s3
  %s6 = scalar_select 0, %s5, %s3
  %s8 = sshll.u32 %s0, 4
  %s9 = int_to_ptr.hbm [resolvable:$true] %s8
  %11 = dma.hbm_to_smem %s9, 16, [#allocation3], [#allocation2]
  %13 = dma.done [#allocation2], 16
  %14 = sfence
  $region1: #{tpu_custom_call.1} parent=0
    #allocation4 [shape = 'u8[8192]{0}', space=vmem, size = 0x2000, scoped, tag = 'input window, operand 1']
    #allocation5 [shape = 's32[2]{0}', space=sflag, size = 0x8, scoped, tag = 'scoped memory for tpu_custom_call.1']
    #allocation6 [shape = 's32[2]{0}', space=sflag, size = 0x8, scoped, tag = 'scoped memory for tpu_custom_call.1']
    #allocation7 [shape = 'u8[8192]{0}', space=vmem, size = 0x2000, scoped, tag = 'output window, operand 0']
    %15 = vsyncpa [#allocation5], 0
    %s16 = scalar_lea.sflag [#allocation5], 1
    %17 = vsyncpa %s16, 0
    %18 = vsyncpa [#allocation6], 0
    %s19 = scalar_lea.sflag [#allocation6], 1
    %20 = vsyncpa %s19, 0
    loop: start=0, step=1, limit=4
    $region2: #{tpu_custom_call.1} parent=1 // loop_pre_header
      _
    $region3: #{tpu_custom_call.1} parent=1 // loop_header
      %s22 = sphi 0, %s26
      %p23 = scmp.ge.s32.totalorder %s22, 4
      %s29 = sphi 0, %s41
      %s30 = sphi 0, %s37
      %s31 = sphi 0, %s29
      %s32 = sphi 0, %s30
      %s33 = sphi 0, %s31
      %s34 = sphi 0, %s32
      %s46 = sphi 0, %s48
      %s49 = sphi 0, %s46
      %s50 = sphi 0, %s49
      %s66 = sphi 0, %s50
      %s74 = sphi 0, %s76
      %s77 = sphi 0, %s74
      %s78 = sphi 0, %s77
      %s94 = sphi 0, %s78
    $region4: #{tpu_custom_call.1} parent=1 // loop_header_branch
      %25 = sbr.rel (%p23) target = $region8
    $region5: #{tpu_custom_call.1} parent=1 // loop_body
      %s27 = ssub.s32 %s22, 1
      %s28 = ssub.s32 %s22, 2
      %s35 = sadd.s32 1, %s30
      %p36 = scmp.ge.s32.totalorder %s35, 1
      %s37 = scalar_select %p36, 0, %s35
      %s38 = sadd.s32 1, %s29
      %s39 = scalar_select %p36, %s38, %s29
      %p40 = scmp.ge.s32.totalorder %s39, 2
      %s41 = scalar_select %p40, 0, %s39
      %s42 = ssub.s32 %s29, %s41
      %s43 = ssub.s32 %s30, %s37
      %s44 = sor.u32 %s42, %s43
      %p45 = scmp.eq.s32.totalorder %s44, 0
      %s47 = sadd.s32 %s46, 1
      %s48 = scalar_select %p45, %s46, %s47
      %p51 = pneg %p45
      %p52 = scmp.eq.s32.totalorder %s22, 1
      %p53 = por %p51, %p52
      %p54 = scmp.ne.s32.totalorder %s46, %s49
      %p55 = scmp.eq.s32.totalorder %s22, 0
      %p56 = por %p54, %p55
      %p57 = scmp.ne.s32.totalorder %s46, %s49
      %p58 = scmp.eq.s32.totalorder %s27, 1
      %p59 = por %p57, %p58
      %p60 = scmp.ne.s32.totalorder %s49, %s50
      %p61 = scmp.eq.s32.totalorder %s27, 0
      %p62 = por %p60, %p61
      %p63 = scmp.ne.s32.totalorder %s49, %s50
      %p64 = scmp.eq.s32.totalorder %s28, 1
      %p65 = por %p63, %p64
      %p67 = scmp.ne.s32.totalorder %s50, %s66
      %p68 = scmp.eq.s32.totalorder %s28, 0
      %p69 = por %p67, %p68
      %s70 = ssub.s32 %s29, %s41
      %s71 = ssub.s32 %s30, %s37
      %s72 = sor.u32 %s70, %s71
      %p73 = scmp.eq.s32.totalorder %s72, 0
      %s75 = sadd.s32 %s74, 1
      %s76 = scalar_select %p73, %s74, %s75
      %p79 = pneg %p73
      %p80 = scmp.eq.s32.totalorder %s22, 1
      %p81 = por %p79, %p80
      %p82 = scmp.ne.s32.totalorder %s74, %s77
      %p83 = scmp.eq.s32.totalorder %s22, 0
      %p84 = por %p82, %p83
      %p85 = scmp.ne.s32.totalorder %s74, %s77
      %p86 = scmp.eq.s32.totalorder %s27, 1
      %p87 = por %p85, %p86
      %p88 = scmp.ne.s32.totalorder %s77, %s78
      %p89 = scmp.eq.s32.totalorder %s27, 0
      %p90 = por %p88, %p89
      %p91 = scmp.ne.s32.totalorder %s77, %s78
      %p92 = scmp.eq.s32.totalorder %s28, 1
      %p93 = por %p91, %p92
      %p95 = scmp.ne.s32.totalorder %s78, %s94
      %p96 = scmp.eq.s32.totalorder %s28, 0
      %p97 = por %p95, %p96
      %p98 = scmp.le.s32.totalorder 1, %s22
      %p99 = scmp.lt.s32.totalorder %s22, 3
      %p100 = pnand %p98, %p99
      %p101 = pneg %p100
      // Predicated region
      $region9: #{tpu_custom_call.1} parent=5 // pred_check
        _
      $region10: #{tpu_custom_call.1} parent=5 // pred_check_branch
        %103 = sbr.rel (%p100) target = $region12
      $region11: #{tpu_custom_call.1} parent=5 // pred_region
        %s104 = ssub.s32 %s22, 1
      $region12: #{tpu_custom_call.1} parent=5 // pred_fallthru
        _
      %p105 = scmp.lt.s32.totalorder %s22, 2
      // Predicated region
      $region13: #{tpu_custom_call.1} parent=5 // pred_check
        %p106 = pneg %p105
      $region14: #{tpu_custom_call.1} parent=5 // pred_check_branch
        %108 = sbr.rel (%p106) target = $region16
      $region15: #{tpu_custom_call.1} parent=5 // pred_region
        // Predicated region
        $region17: #{tpu_custom_call.1} parent=15 // pred_check
          %p109 = pneg %p56
        $region18: #{tpu_custom_call.1} parent=15 // pred_check_branch
          %111 = sbr.rel (%p109) target = $region20
        $region19: #{tpu_custom_call.1} parent=15 // pred_region
          %s112 = sand.u32 %s46, 1
          %s113 = scalar_lea.sflag [#allocation5], %s112
          %s114 = sand.u32 %s46, 1
          %s115 = smul.addr %s114, 8
          %s116 = scalar_lea.vmem [#allocation4], %s115
          %118 = vsyncadd %s113, 0
          %s119 = smul.addr %s30, 8
          %s120 = smul.addr %s29, 8
          %s121 = sadd.s32 %s119, %s120
          %s122 = scalar_lea.hbm %s1, %s121
          %s124 = sshll.u32 %s122, 4
          %s125 = int_to_ptr.hbm [resolvable:$true] %s124
          %s126 = sshll.u32 %s116, 4
          %s127 = int_to_ptr.vmem [resolvable:$true] %s126
          %129 = dma.hbm_to_vmem [thread:$0]  %s125, 128, %s127, %s113
        $region20: #{tpu_custom_call.1} parent=15 // pred_fallthru
          _
      $region16: #{tpu_custom_call.1} parent=5 // pred_fallthru
        _
      %p130 = scmp.le.s32.totalorder 1, %s22
      %p131 = scmp.lt.s32.totalorder %s22, 3
      %p132 = pnand %p130, %p131
      %p133 = pneg %p132
      // Predicated region
      $region21: #{tpu_custom_call.1} parent=5 // pred_check
        _
      $region22: #{tpu_custom_call.1} parent=5 // pred_check_branch
        %135 = sbr.rel (%p132) target = $region24
      $region23: #{tpu_custom_call.1} parent=5 // pred_region
        %s136 = ssub.s32 %s22, 1
        %s137 = sand.u32 %s49, 1
        %s138 = scalar_lea.sflag [#allocation5], %s137
        %s139 = sand.u32 %s49, 1
        %s140 = smul.addr %s139, 8
        %s141 = scalar_lea.vmem [#allocation4], %s140
        // Predicated region
        $region25: #{tpu_custom_call.1} parent=23 // pred_check
          %p142 = pneg %p62
        $region26: #{tpu_custom_call.1} parent=23 // pred_check_branch
          %144 = sbr.rel (%p142) target = $region28
        $region27: #{tpu_custom_call.1} parent=23 // pred_region
          %146 = dma.done %s138, 128
        $region28: #{tpu_custom_call.1} parent=23 // pred_fallthru
          _
        %s147 = sand.u32 %s49, 1
        %s148 = scalar_lea.sflag [#allocation5], %s147
        %s149 = sand.u32 %s49, 1
        %s150 = smul.addr %s149, 8
        %s151 = scalar_lea.vmem [#allocation4], %s150
        %p152 = pneg %p62
        %p153 = pneg %p59
        %p154 = pneg %p90
        %p155 = pneg %p87
        %s156 = sand.u32 %s77, 1
        %s157 = scalar_lea.sflag [#allocation6], %s156
        %s158 = sand.u32 %s77, 1
        %s159 = smul.addr %s158, 8
        %s160 = scalar_lea.vmem [#allocation7], %s159
        %s161 = sld [smem:[#allocation3 + %s31]]
        %v162 = vld [vmem:[%s141] sm:$0xff]
        %v163 = vstv %s161
        %v164 = vmul.f32 %v162, %v163
        %165 = vst [vmem:[%s160] sm:$0xff] %v164
        %s166 = sand.u32 %s77, 1
        %s167 = scalar_lea.sflag [#allocation6], %s166
        %s168 = sand.u32 %s77, 1
        %s169 = smul.addr %s168, 8
        %s170 = scalar_lea.vmem [#allocation7], %s169
        // Predicated region
        $region29: #{tpu_custom_call.1} parent=23 // pred_check
          %p171 = pneg %p87
        $region30: #{tpu_custom_call.1} parent=23 // pred_check_branch
          %173 = sbr.rel (%p171) target = $region32
        $region31: #{tpu_custom_call.1} parent=23 // pred_region
          %175 = vsyncadd %s167, 0
          %s176 = smul.addr %s32, 8
          %s177 = smul.addr %s31, 8
          %s178 = sadd.s32 %s176, %s177
          %s179 = scalar_lea.hbm %s2, %s178
          %s181 = sshll.u32 %s170, 4
          %s182 = int_to_ptr.vmem [resolvable:$true] %s181
          %s183 = sshll.u32 %s179, 4
          %s184 = int_to_ptr.hbm [resolvable:$true] %s183
          %186 = dma.vmem_to_hbm [thread:$0]  %s182, 128, %s184, %s167
        $region32: #{tpu_custom_call.1} parent=23 // pred_fallthru
          _
      $region24: #{tpu_custom_call.1} parent=5 // pred_fallthru
        _
      %p187 = scmp.le.s32.totalorder 2, %s22
      // Predicated region
      $region33: #{tpu_custom_call.1} parent=5 // pred_check
        %p188 = pneg %p187
      $region34: #{tpu_custom_call.1} parent=5 // pred_check_branch
        %190 = sbr.rel (%p188) target = $region36
      $region35: #{tpu_custom_call.1} parent=5 // pred_region
        %s191 = ssub.s32 %s22, 2
        // Predicated region
        $region37: #{tpu_custom_call.1} parent=35 // pred_check
          %p192 = pneg %p93
        $region38: #{tpu_custom_call.1} parent=35 // pred_check_branch
          %194 = sbr.rel (%p192) target = $region40
        $region39: #{tpu_custom_call.1} parent=35 // pred_region
          %s195 = sand.u32 %s78, 1
          %s196 = scalar_lea.sflag [#allocation6], %s195
          %s197 = sand.u32 %s78, 1
          %s198 = smul.addr %s197, 8
          %s199 = scalar_lea.vmem [#allocation7], %s198
          %201 = dma.done %s196, 128
        $region40: #{tpu_custom_call.1} parent=35 // pred_fallthru
          _
      $region36: #{tpu_custom_call.1} parent=5 // pred_fallthru
        _
    $region6: #{tpu_custom_call.1} parent=1 // loop_footer
      %s26 = sadd.s32 1, %s22
    $region7: #{tpu_custom_call.1} parent=1 // loop_footer_branch
      %21 = sbr.rel target = $region3
    $region8: #{tpu_custom_call.1} parent=1 // loop_exit
      _
    %202 = vsyncpa [#allocation5], 1
    %s203 = scalar_lea.sflag [#allocation5], 1
    %204 = vsyncpa %s203, 1
    %205 = vsyncpa [#allocation6], 1
    %s206 = scalar_lea.sflag [#allocation6], 1
    %207 = vsyncpa %s206, 1

</llo_original>
